<compile_context>
chip_gen: v5e
topology: v5e:2x2
jax: 0.10.0
libtpu: 0.0.40
codegen_flags: <defaults>
</compile_context>

<pallas_src>
import functools
import math

import numpy as np
import jax
import jax.numpy as jnp
from jax.experimental import pallas as pl
from jax.experimental.pallas import tpu as pltpu

_LN_EPS = 1e-5


def _detect_vmem_limit():
    # v5e / v6e have 128 MiB physical VMEM; default (v7x-safe) is 48 MiB.
    try:
        kind = jax.devices()[0].device_kind.lower()
    except Exception:
        kind = ""
    if "v5" in kind or "v6" in kind:
        return 100 * 1024 * 1024
    return 48 * 1024 * 1024


_VMEM_LIMIT = _detect_vmem_limit()


def _cparams(ngrid):
    return pltpu.CompilerParams(dimension_semantics=("parallel",) * ngrid,
                                vmem_limit_bytes=_VMEM_LIMIT)


# -----------------------------------------------------------------------------
# In-kernel helpers (element-wise math in f32; bf16 only as MXU/IO dtype)
# -----------------------------------------------------------------------------
def _layernorm_f32(x, g, b):
    mu = jnp.mean(x, axis=-1, keepdims=True)
    xc = x - mu
    var = jnp.mean(xc * xc, axis=-1, keepdims=True)
    return xc * jax.lax.rsqrt(var + _LN_EPS) * g + b


def _apply_act(y, act):
    if act == "gelu":
        # TODO(synk): tanh-approx GELU (PyTorch nn.GELU default is exact erf).
        c = math.sqrt(2.0 / math.pi)
        return 0.5 * y * (1.0 + jnp.tanh(c * (y + 0.044715 * y * y * y)))
    if act == "silu":
        return y * pl.reciprocal(1.0 + jnp.exp(-y), approx=True)
    return y


# -----------------------------------------------------------------------------
# Generic small kernels (linear / LN-linear / LN) — used by the glue layers
# -----------------------------------------------------------------------------
def _linear_kernel(x_ref, w_ref, b_ref, o_ref, *, act):
    y = jnp.dot(x_ref[...], w_ref[...], preferred_element_type=jnp.float32)
    y = _apply_act(y + b_ref[...], act)
    o_ref[...] = y.astype(o_ref.dtype)


def _ln_linear_kernel(x_ref, g_ref, bt_ref, w_ref, b_ref, o_ref, *, act):
    xn = _layernorm_f32(x_ref[...].astype(jnp.float32), g_ref[...], bt_ref[...])
    y = jnp.dot(xn.astype(jnp.bfloat16), w_ref[...],
                preferred_element_type=jnp.float32)
    y = _apply_act(y + b_ref[...], act)
    o_ref[...] = y.astype(o_ref.dtype)


def _layernorm_kernel(x_ref, g_ref, b_ref, o_ref):
    xn = _layernorm_f32(x_ref[...].astype(jnp.float32), g_ref[...], b_ref[...])
    o_ref[...] = xn.astype(o_ref.dtype)


# -----------------------------------------------------------------------------
# Fused Swin-block kernels
# -----------------------------------------------------------------------------
def _swin_attn_kernel(x_ref, g1_ref, b1_ref, wq_ref, bq_ref, wk_ref, bk_ref,
                      wv_ref, bv_ref, bias_ref, pw_ref, pb_ref, o_ref, *,
                      heads, d, ws, G):
    # x_ref : (1, ws, G*ws, C) bf16 — one row of G windows in image layout
    # bias  : (G or 1, heads, N, N) bf16 (rel-pos bias (+ shift mask))
    N = ws * ws
    C = heads * d
    x = x_ref[0].astype(jnp.float32)                              # (ws, G*ws, C)
    xn = _layernorm_f32(x, g1_ref[...], b1_ref[...])

    # in-VMEM window partition (replaces the old wrapper-side HBM transpose)
    xw = xn.astype(jnp.bfloat16).reshape(ws, G, ws, C)
    xw = jnp.transpose(xw, (1, 0, 2, 3)).reshape(G * N, C)

    def proj(w_ref, b_ref):
        y = jnp.dot(xw, w_ref[...], preferred_element_type=jnp.float32)
        y = (y + b_ref[...]).astype(jnp.bfloat16)
        y = y.reshape(G, N, heads, d)
        return jnp.transpose(y, (0, 2, 1, 3)).reshape(G * heads, N, d)

    qh = proj(wq_ref, bq_ref)          # attention scale folded into wq / bq
    kh = proj(wk_ref, bk_ref)
    vh = proj(wv_ref, bv_ref)

    # head-batched attention: one batched matmul, no per-head lane slices
    s = jax.lax.dot_general(qh, kh, (((2,), (2,)), ((0,), (0,))),
                            preferred_element_type=jnp.float32)   # (G*heads,N,N)
    bias = bias_ref[...].astype(jnp.float32)                      # (Gb,heads,N,N)
    s = (s.reshape(G, heads, N, N) + bias).reshape(G * heads, N, N)
    s = s - jnp.max(s, axis=-1, keepdims=True)
    p = jnp.exp(s)
    p = p * pl.reciprocal(jnp.sum(p, axis=-1, keepdims=True), approx=True)

    o = jax.lax.dot_general(p.astype(jnp.bfloat16), vh,
                            (((2,), (1,)), ((0,), (0,))),
                            preferred_element_type=jnp.float32)   # (G*heads,N,d)
    o = o.astype(jnp.bfloat16).reshape(G, heads, N, d)
    o = jnp.transpose(o, (0, 2, 1, 3)).reshape(G * N, C)

    # single full-K output projection (K = C, not K = head_dim)
    y = jnp.dot(o, pw_ref[...], preferred_element_type=jnp.float32) + pb_ref[...]
    y = y.astype(jnp.bfloat16).reshape(G, ws, ws, C)
    y = jnp.transpose(y, (1, 0, 2, 3)).reshape(ws, G * ws, C)      # un-partition
    o_ref[0] = y


def _block_mlp_kernel(x_ref, h_ref, t_ref, g_ref, bt_ref, w1_ref, b1_ref,
                      w2_ref, b2_ref, o_ref):
    # fused: (shortcut + attn + temb) -> LayerNorm -> fc1 -> GELU -> fc2 -> +res
    x = x_ref[0].astype(jnp.float32) + h_ref[0].astype(jnp.float32) + t_ref[0]
    xn = _layernorm_f32(x, g_ref[...], bt_ref[...])
    h = jnp.dot(xn.astype(jnp.bfloat16), w1_ref[...],
                preferred_element_type=jnp.float32) + b1_ref[...]
    h = _apply_act(h, "gelu")
    y = jnp.dot(h.astype(jnp.bfloat16), w2_ref[...],
                preferred_element_type=jnp.float32) + b2_ref[...]
    o_ref[0] = (x + y).astype(o_ref.dtype)


def _final_head_kernel(x_ref, gu_ref, bu_ref, we_ref, gf_ref, bf_ref, wo_ref,
                       o_ref, *, R, C, tr, ncls):
    # fused: norm_up -> 4x expand -> pixel shuffle -> final LN -> 1x1 head
    x = x_ref[0].astype(jnp.float32).reshape(tr * R, C)
    xn = _layernorm_f32(x, gu_ref[...], bu_ref[...])
    e = jnp.dot(xn.astype(jnp.bfloat16), we_ref[...],
                preferred_element_type=jnp.float32)               # (tr*R, 16C)
    # channel layout of the expand output is (p1, p2, c); shuffle in VMEM
    e = e.astype(jnp.bfloat16).reshape(tr, R, 4, 4 * C)
    e = jnp.transpose(e, (0, 2, 1, 3)).reshape(tr * 4 * R, 4 * C)
    e = e.reshape(tr * 4 * R * 4, C)                              # rows=(r1,p1,r2,p2)
    en = _layernorm_f32(e.astype(jnp.float32), gf_ref[...], bf_ref[...])
    y = jnp.dot(en.astype(jnp.bfloat16), wo_ref[...],
                preferred_element_type=jnp.float32)               # (.., ncls)
    o_ref[0] = y.reshape(4 * tr, 4 * R, ncls).astype(o_ref.dtype)


# -----------------------------------------------------------------------------
# Cached pallas_call builders (one compile per distinct shape)
# -----------------------------------------------------------------------------
@functools.lru_cache(maxsize=None)
def _linear_call(M, K, N, tm, act, out_dtype):
    call = pl.pallas_call(
        functools.partial(_linear_kernel, act=act),
        out_shape=jax.ShapeDtypeStruct((M, N), out_dtype),
        grid=(pl.cdiv(M, tm),),
        in_specs=[pl.BlockSpec((tm, K), lambda i: (i, 0)),
                  pl.BlockSpec((K, N), lambda i: (0, 0)),
                  pl.BlockSpec((1, N), lambda i: (0, 0))],
        out_specs=pl.BlockSpec((tm, N), lambda i: (i, 0)),
        compiler_params=_cparams(1))
    return jax.jit(call)


@functools.lru_cache(maxsize=None)
def _ln_linear_call(M, K, N, tm, act, out_dtype):
    call = pl.pallas_call(
        functools.partial(_ln_linear_kernel, act=act),
        out_shape=jax.ShapeDtypeStruct((M, N), out_dtype),
        grid=(pl.cdiv(M, tm),),
        in_specs=[pl.BlockSpec((tm, K), lambda i: (i, 0)),
                  pl.BlockSpec((1, K), lambda i: (0, 0)),
                  pl.BlockSpec((1, K), lambda i: (0, 0)),
                  pl.BlockSpec((K, N), lambda i: (0, 0)),
                  pl.BlockSpec((1, N), lambda i: (0, 0))],
        out_specs=pl.BlockSpec((tm, N), lambda i: (i, 0)),
        compiler_params=_cparams(1))
    return jax.jit(call)


@functools.lru_cache(maxsize=None)
def _layernorm_call(M, C, tm):
    call = pl.pallas_call(
        _layernorm_kernel,
        out_shape=jax.ShapeDtypeStruct((M, C), jnp.bfloat16),
        grid=(pl.cdiv(M, tm),),
        in_specs=[pl.BlockSpec((tm, C), lambda i: (i, 0)),
                  pl.BlockSpec((1, C), lambda i: (0, 0)),
                  pl.BlockSpec((1, C), lambda i: (0, 0))],
        out_specs=pl.BlockSpec((tm, C), lambda i: (i, 0)),
        compiler_params=_cparams(1))
    return jax.jit(call)


@functools.lru_cache(maxsize=None)
def _swin_attn_call(B, H, W, C, heads, ws, nwbias):
    N = ws * ws
    d = C // heads
    nwh, nww = H // ws, W // ws
    G = nww
    if nwbias > 1:
        bias_spec = pl.BlockSpec((G, heads, N, N), lambda b, r: (r, 0, 0, 0))
    else:
        bias_spec = pl.BlockSpec((1, heads, N, N), lambda b, r: (0, 0, 0, 0))
    vec_c = pl.BlockSpec((1, C), lambda b, r: (0, 0))
    mat_c = pl.BlockSpec((C, C), lambda b, r: (0, 0))
    x_spec = pl.BlockSpec((1, ws, W, C), lambda b, r: (b, r, 0, 0))
    call = pl.pallas_call(
        functools.partial(_swin_attn_kernel, heads=heads, d=d, ws=ws, G=G),
        out_shape=jax.ShapeDtypeStruct((B, H, W, C), jnp.bfloat16),
        grid=(B, nwh),
        in_specs=[x_spec, vec_c, vec_c,
                  mat_c, vec_c, mat_c, vec_c, mat_c, vec_c,
                  bias_spec, mat_c, vec_c],
        out_specs=x_spec,
        compiler_params=_cparams(2))
    return jax.jit(call)


@functools.lru_cache(maxsize=None)
def _block_mlp_call(B, L, C, Hd, tm):
    row = lambda b, i: (b, i, 0)
    const = lambda b, i: (0, 0)
    call = pl.pallas_call(
        _block_mlp_kernel,
        out_shape=jax.ShapeDtypeStruct((B, L, C), jnp.bfloat16),
        grid=(B, L // tm),
        in_specs=[pl.BlockSpec((1, tm, C), row),
                  pl.BlockSpec((1, tm, C), row),
                  pl.BlockSpec((1, 1, C), lambda b, i: (b, 0, 0)),
                  pl.BlockSpec((1, C), const),
                  pl.BlockSpec((1, C), const),
                  pl.BlockSpec((C, Hd), const),
                  pl.BlockSpec((1, Hd), const),
                  pl.BlockSpec((Hd, C), const),
                  pl.BlockSpec((1, C), const)],
        out_specs=pl.BlockSpec((1, tm, C), row),
        compiler_params=_cparams(2))
    return jax.jit(call)


@functools.lru_cache(maxsize=None)
def _final_head_call(B, R, C, ncls, tr):
    E = 16 * C
    const = lambda b, i: (0, 0)
    call = pl.pallas_call(
        functools.partial(_final_head_kernel, R=R, C=C, tr=tr, ncls=ncls),
        out_shape=jax.ShapeDtypeStruct((B, 4 * R, 4 * R, ncls), jnp.float32),
        grid=(B, R // tr),
        in_specs=[pl.BlockSpec((1, tr, R, C), lambda b, i: (b, i, 0, 0)),
                  pl.BlockSpec((1, C), const),
                  pl.BlockSpec((1, C), const),
                  pl.BlockSpec((C, E), const),
                  pl.BlockSpec((1, C), const),
                  pl.BlockSpec((1, C), const),
                  pl.BlockSpec((C, ncls), const)],
        out_specs=pl.BlockSpec((1, 4 * tr, 4 * R, ncls), lambda b, i: (b, i, 0, 0)),
        compiler_params=_cparams(2))
    return jax.jit(call)


# -----------------------------------------------------------------------------
# Tiling helpers + thin wrappers
# -----------------------------------------------------------------------------
def _pick_tile(M, pref):
    if M <= pref:
        return M
    t = (pref // 8) * 8
    while t >= 8:
        if M % t == 0:
            return t
        t -= 8
    return (pref // 8) * 8


def _row_tile(M, row_bytes, cap=2048):
    budget = 4 * 1024 * 1024 if _VMEM_LIMIT > 64 * 1024 * 1024 else 2 * 1024 * 1024
    pref = max(256, min(cap, budget // max(row_bytes, 1)))
    return _pick_tile(M, pref)


def _divisor_tile(L, cap=1024):
    best = 0
    t = 8
    while t <= min(L, cap):
        if L % t == 0:
            best = t
        t += 8
    return best if best else L


def pallas_linear(x, w, b=None, act="none", out_dtype=jnp.bfloat16):
    K, N = x.shape[-1], w.shape[-1]
    lead = x.shape[:-1]
    x2 = x.reshape(-1, K).astype(jnp.bfloat16)
    M = x2.shape[0]
    tm = _row_tile(M, 2 * (K + N))
    if b is None:
        b = jnp.zeros((N,), jnp.float32)
    out = _linear_call(M, K, N, tm, act, out_dtype)(
        x2, w.astype(jnp.bfloat16), b.reshape(1, N).astype(jnp.float32))
    return out.reshape(lead + (N,))


def pallas_ln_linear(x, g, bt, w, b=None, act="none", out_dtype=jnp.bfloat16):
    K, N = x.shape[-1], w.shape[-1]
    lead = x.shape[:-1]
    x2 = x.reshape(-1, K).astype(jnp.bfloat16)
    M = x2.shape[0]
    tm = _row_tile(M, 2 * (K + N))
    if b is None:
        b = jnp.zeros((N,), jnp.float32)
    out = _ln_linear_call(M, K, N, tm, act, out_dtype)(
        x2, g.reshape(1, K).astype(jnp.float32), bt.reshape(1, K).astype(jnp.float32),
        w.astype(jnp.bfloat16), b.reshape(1, N).astype(jnp.float32))
    return out.reshape(lead + (N,))


def pallas_layernorm(x, g, b):
    C = x.shape[-1]
    lead = x.shape[:-1]
    x2 = x.reshape(-1, C).astype(jnp.bfloat16)
    M = x2.shape[0]
    tm = _row_tile(M, 4 * C)
    out = _layernorm_call(M, C, tm)(
        x2, g.reshape(1, C).astype(jnp.float32), b.reshape(1, C).astype(jnp.float32))
    return out.reshape(lead + (C,))


def pallas_swin_attention(x4, blk):
    B, H, W, C = x4.shape
    call = _swin_attn_call(B, H, W, C, blk["heads"], blk["ws"],
                           int(blk["attn_bias"].shape[0]))
    return call(x4.astype(jnp.bfloat16), blk["norm1_g"], blk["norm1_b"],
                blk["wq"], blk["bq"], blk["wk"], blk["bk"], blk["wv"], blk["bv"],
                blk["attn_bias"], blk["proj_w"], blk["proj_b"])


def pallas_block_mlp(x, attn, tadd, blk):
    B, L, C = x.shape
    Hd = blk["fc1_w"].shape[-1]
    tm = _divisor_tile(L)
    call = _block_mlp_call(B, L, C, Hd, tm)
    return call(x.astype(jnp.bfloat16), attn.astype(jnp.bfloat16),
                tadd.reshape(B, 1, C).astype(jnp.float32),
                blk["norm2_g"], blk["norm2_b"],
                blk["fc1_w"], blk["fc1_b"], blk["fc2_w"], blk["fc2_b"])


def pallas_final_head(h, params, R, C, ncls):
    B = h.shape[0]
    tr = 8 if R % 8 == 0 else R
    call = _final_head_call(B, R, C, ncls, tr)
    return call(h.reshape(B, R, R, C).astype(jnp.bfloat16),
                params["norm_up_g"].reshape(1, C).astype(jnp.float32),
                params["norm_up_b"].reshape(1, C).astype(jnp.float32),
                params["final_up"]["expand_w"],
                params["final_up"]["norm_g"].reshape(1, C).astype(jnp.float32),
                params["final_up"]["norm_b"].reshape(1, C).astype(jnp.float32),
                params["out_w"])


# -----------------------------------------------------------------------------
# Swin helpers (host-side precompute) + timestep table
# -----------------------------------------------------------------------------
def relative_position_index(ws):
    coords = np.stack(np.meshgrid(np.arange(ws), np.arange(ws), indexing="ij"))
    cf = coords.reshape(2, -1)
    rel = (cf[:, :, None] - cf[:, None, :]).transpose(1, 2, 0).astype(np.int64)
    rel[:, :, 0] += ws - 1
    rel[:, :, 1] += ws - 1
    rel[:, :, 0] *= 2 * ws - 1
    return rel.sum(-1)                                  # (N, N)


def attention_mask(H, W, ws, shift):
    if shift == 0:
        return None
    img_mask = np.zeros((1, H, W, 1), np.float32)
    cnt = 0
    for hs in (slice(0, -ws), slice(-ws, -shift), slice(-shift, None)):
        for wsl in (slice(0, -ws), slice(-ws, -shift), slice(-shift, None)):
            img_mask[:, hs, wsl, :] = cnt
            cnt += 1
    m = img_mask.reshape(1, H // ws, ws, W // ws, ws, 1)
    m = m.transpose(0, 1, 3, 2, 4, 5).reshape(-1, ws * ws)
    am = m[:, None, :] - m[:, :, None]
    am = np.where(am != 0, -100.0, 0.0).astype(np.float32)
    return jnp.asarray(am)                              # (nW, N, N) row-major windows


def timestep_table(T, d_model):
    emb = np.arange(0, d_model, 2, dtype=np.float64) / d_model * math.log(10000.0)
    emb = np.exp(-emb)
    pos = np.arange(T, dtype=np.float64)
    emb = pos[:, None] * emb[None, :]
    emb = np.stack([np.sin(emb), np.cos(emb)], axis=-1).reshape(T, d_model)
    return emb.astype(np.float32)


# -----------------------------------------------------------------------------
# Parameter construction (deterministic, synthetic)
# -----------------------------------------------------------------------------
class ParamFactory:
    def __init__(self, seed=0):
        self._key = jax.random.PRNGKey(seed)

    def normal(self, shape, std=0.02):
        self._key, sub = jax.random.split(self._key)
        return std * jax.random.normal(sub, shape, dtype=jnp.float32)

    def zeros(self, shape):
        return jnp.zeros(shape, jnp.float32)

    def ones(self, shape):
        return jnp.ones(shape, jnp.float32)


def init_block(pf, dim, heads, window_size, shift, resolution, temb_dim, mlp_ratio):
    ws = window_size
    if resolution <= window_size:
        ws, shift = resolution, 0
    N = ws * ws
    hidden = int(dim * mlp_ratio)
    d = dim // heads
    scale = d ** -0.5
    # precompute relative-position bias (+ shift mask) once at build time
    rel_table = pf.normal(((2 * ws - 1) ** 2, heads))
    rel_index = jnp.asarray(relative_position_index(ws).reshape(-1), jnp.int32)
    rel = jnp.take(rel_table, rel_index, axis=0).reshape(N, N, heads)
    rel = jnp.transpose(rel, (2, 0, 1))                 # (heads, N, N)
    mask = attention_mask(resolution, resolution, ws, shift)
    if mask is not None:
        attn_bias = rel[None] + mask[:, None]           # (nW, heads, N, N)
    else:
        attn_bias = rel[None]                            # (1, heads, N, N)
    qkv_w = pf.normal((dim, 3 * dim))
    qkv_b = pf.zeros((3 * dim,))
    wq = qkv_w[:, :dim] * scale                          # fold attention scale
    bq = qkv_b[:dim] * scale
    wk, bk = qkv_w[:, dim:2 * dim], qkv_b[dim:2 * dim]
    wv, bv = qkv_w[:, 2 * dim:], qkv_b[2 * dim:]
    return dict(
        dim=dim, heads=heads, ws=ws, shift=shift,
        attn_bias=attn_bias.astype(jnp.bfloat16),
        norm1_g=pf.ones((1, dim)), norm1_b=pf.zeros((1, dim)),
        wq=wq.astype(jnp.bfloat16), bq=bq.reshape(1, dim).astype(jnp.float32),
        wk=wk.astype(jnp.bfloat16), bk=bk.reshape(1, dim).astype(jnp.float32),
        wv=wv.astype(jnp.bfloat16), bv=bv.reshape(1, dim).astype(jnp.float32),
        proj_w=pf.normal((dim, dim)).astype(jnp.bfloat16),
        proj_b=pf.zeros((1, dim)),
        temb_w=pf.normal((temb_dim, dim)), temb_b=pf.zeros((dim,)),
        norm2_g=pf.ones((1, dim)), norm2_b=pf.zeros((1, dim)),
        fc1_w=pf.normal((dim, hidden)).astype(jnp.bfloat16),
        fc1_b=pf.zeros((1, hidden)),
        fc2_w=pf.normal((hidden, dim)).astype(jnp.bfloat16),
        fc2_b=pf.zeros((1, dim)),
    )


def build_swin_unet_tem(seed=0):
    cfg = dict(img=224, patch=4, in_ch=4, embed=96, depths=(2, 2, 6, 2),
               heads=(3, 6, 12, 24), ws=7, mlp_ratio=4.0, T=1000, ch=64, ncls=1)
    pf = ParamFactory(seed)
    R = cfg["img"] // cfg["patch"]            # 56
    temb_dim = 4 * cfg["ch"]                  # 256
    nl = 4
    p = {}
    p["time"] = dict(table=jnp.asarray(timestep_table(cfg["T"], cfg["ch"])),
                     w1=pf.normal((cfg["ch"], temb_dim)).astype(jnp.bfloat16),
                     b1=pf.zeros((temb_dim,)),
                     w2=pf.normal((temb_dim, temb_dim)).astype(jnp.bfloat16),
                     b2=pf.zeros((temb_dim,)))
    p["patch_embed"] = dict(
        proj_w=pf.normal((cfg["in_ch"] * cfg["patch"] ** 2, cfg["embed"])).astype(jnp.bfloat16),
        proj_b=pf.zeros((cfg["embed"],)),
        norm_g=pf.ones((cfg["embed"],)), norm_b=pf.zeros((cfg["embed"],)))

    layers = []
    for i in range(nl):
        dim = cfg["embed"] * (2 ** i)
        res = R // (2 ** i)
        blocks = [init_block(pf, dim, cfg["heads"][i], cfg["ws"],
                             0 if b % 2 == 0 else cfg["ws"] // 2,
                             res, temb_dim, cfg["mlp_ratio"])
                  for b in range(cfg["depths"][i])]
        layer = dict(blocks=blocks, res=res, dim=dim)
        if i < nl - 1:   # PatchMerging: LN(4C) + Linear(4C -> 2C, no bias)
            layer["down"] = dict(norm_g=pf.ones((4 * dim,)), norm_b=pf.zeros((4 * dim,)),
                                 red_w=pf.normal((4 * dim, 2 * dim)).astype(jnp.bfloat16))
        layers.append(layer)
    p["layers"] = layers

    bdim = cfg["embed"] * 8
    p["norm_g"], p["norm_b"] = pf.ones((bdim,)), pf.zeros((bdim,))
    p["first_up"] = dict(expand_w=pf.normal((bdim, 2 * bdim)).astype(jnp.bfloat16),
                         norm_g=pf.ones((bdim // 2,)), norm_b=pf.zeros((bdim // 2,)))

    layers_up, concat = [], []
    for i in range(1, nl):
        dim = cfg["embed"] * (2 ** (nl - 1 - i))
        res = R // (2 ** (nl - 1 - i))
        concat.append(dict(w=pf.normal((2 * dim, dim)).astype(jnp.bfloat16),
                           b=pf.zeros((dim,))))
        blocks = [init_block(pf, dim, cfg["heads"][nl - 1 - i], cfg["ws"],
                             0 if b % 2 == 0 else cfg["ws"] // 2,
                             res, temb_dim, cfg["mlp_ratio"])
                  for b in range(cfg["depths"][nl - 1 - i])]
        layer = dict(blocks=blocks, res=res, dim=dim)
        if i < nl - 1:  # PatchExpand: Linear(C -> 2C, no bias) + LN(C/2)
            layer["up"] = dict(expand_w=pf.normal((dim, 2 * dim)).astype(jnp.bfloat16),
                               norm_g=pf.ones((dim // 2,)), norm_b=pf.zeros((dim // 2,)))
        layers_up.append(layer)
    p["layers_up"], p["concat"] = layers_up, concat

    p["norm_up_g"], p["norm_up_b"] = pf.ones((cfg["embed"],)), pf.zeros((cfg["embed"],))
    p["final_up"] = dict(
        expand_w=pf.normal((cfg["embed"], 16 * cfg["embed"])).astype(jnp.bfloat16),
        norm_g=pf.ones((cfg["embed"],)), norm_b=pf.zeros((cfg["embed"],)))
    p["out_w"] = pf.normal((cfg["embed"], cfg["ncls"])).astype(jnp.bfloat16)

    # stack every block's temb projection into one matmul
    all_blocks = []
    for layer in layers:
        all_blocks += layer["blocks"]
    for layer in layers_up:
        all_blocks += layer["blocks"]
    off, tw, tb = 0, [], []
    for blk in all_blocks:
        blk["temb_off"] = off
        tw.append(blk.pop("temb_w"))
        tb.append(blk.pop("temb_b"))
        off += blk["dim"]
    p["temb_all_w"] = jnp.concatenate(tw, axis=1).astype(jnp.bfloat16)
    p["temb_all_b"] = jnp.concatenate(tb, axis=0)
    return cfg, p


# -----------------------------------------------------------------------------
# Forward pieces
# -----------------------------------------------------------------------------
def patch_embed_fwd(x, p, patch):
    B, C, H, W = x.shape
    ph, pw = H // patch, W // patch
    x = x.reshape(B, C, ph, patch, pw, patch)
    x = x.transpose(0, 2, 4, 1, 3, 5).reshape(B, ph * pw, C * patch * patch)
    x = pallas_linear(x, p["proj_w"], p["proj_b"])       # stride-4 conv == matmul
    return pallas_layernorm(x, p["norm_g"], p["norm_b"])


def swin_block_fwd(x, tadd, blk, H, W):
    B, L, C = x.shape
    shift = blk["shift"]
    x4 = x.reshape(B, H, W, C)
    xs = jnp.roll(x4, (-shift, -shift), (1, 2)) if shift > 0 else x4
    # fused: LN1 -> qkv -> head-batched window attention -> proj  (in image layout)
    attn = pallas_swin_attention(xs, blk)                # (B, H, W, C)
    if shift > 0:
        attn = jnp.roll(attn, (shift, shift), (1, 2))
    attn = attn.reshape(B, L, C)
    # TODO(synk): exact temb injection point of SwinTransformerSysTem unknown;
    # added after the window-attention residual (diffusion-UNet style).
    # fused: (shortcut + attn + temb) -> norm2 -> fc1 -> GELU -> fc2 -> +residual
    return pallas_block_mlp(x, attn, tadd, blk)


def patch_merging_fwd(x, p, H, W):
    B, L, C = x.shape
    x = x.reshape(B, H, W, C)
    x = jnp.concatenate([x[:, 0::2, 0::2], x[:, 1::2, 0::2],
                         x[:, 0::2, 1::2], x[:, 1::2, 1::2]], axis=-1)
    x = x.reshape(B, (H // 2) * (W // 2), 4 * C)
    return pallas_ln_linear(x, p["norm_g"], p["norm_b"], p["red_w"], None)


def patch_expand_fwd(x, p, H, W, pre_norm=None):
    B, L, C = x.shape
    if pre_norm is not None:      # fuse a preceding LayerNorm into the expand
        x = pallas_ln_linear(x, pre_norm[0], pre_norm[1], p["expand_w"], None)
    else:
        x = pallas_linear(x, p["expand_w"], None)         # (B, L, 2C)
    c = C // 2
    x = x.reshape(B, H, W, 2, 2, c).transpose(0, 1, 3, 2, 4, 5)
    x = x.reshape(B, 4 * L, c)
    return pallas_layernorm(x, p["norm_g"], p["norm_b"])


def swin_unet_tem_forward(cfg, params, x, t):
    # SwinUnetTem.forward: repeat single-channel input
    if x.shape[1] == 1:
        x = jnp.tile(x, (1, 3, 1, 1))
    B = x.shape[0]
    R = cfg["img"] // cfg["patch"]

    # time embedding: table lookup -> Linear -> Swish -> Linear
    temb = params["time"]["table"][t]
    temb = pallas_linear(temb, params["time"]["w1"], params["time"]["b1"], act="silu")
    temb = pallas_linear(temb, params["time"]["w2"], params["time"]["b2"])
    temb_sw = jax.nn.silu(temb.astype(jnp.float32))
    # all per-block temb projections as one stacked matmul
    tadd_all = pallas_linear(temb_sw, params["temb_all_w"], params["temb_all_b"],
                             out_dtype=jnp.float32)

    def block_tadd(blk):
        off, dim = blk["temb_off"], blk["dim"]
        return tadd_all[:, off:off + dim]

    # ---------------- encoder ----------------
    h = patch_embed_fwd(x, params["patch_embed"], cfg["patch"])
    skips = []
    for layer in params["layers"]:
        skips.append(h)
        res = layer["res"]
        for blk in layer["blocks"]:
            h = swin_block_fwd(h, block_tadd(blk), blk, res, res)
        if "down" in layer:
            h = patch_merging_fwd(h, layer["down"], res, res)

    # ---------------- decoder ----------------
    h = patch_expand_fwd(h, params["first_up"], R // 8, R // 8,
                         pre_norm=(params["norm_g"], params["norm_b"]))
    for i in range(1, 4):
        layer = params["layers_up"][i - 1]
        res = layer["res"]
        h = jnp.concatenate([h, skips[3 - i]], axis=-1)
        h = pallas_linear(h, params["concat"][i - 1]["w"], params["concat"][i - 1]["b"])
        for blk in layer["blocks"]:
            h = swin_block_fwd(h, block_tadd(blk), blk, res, res)
        if "up" in layer:
            h = patch_expand_fwd(h, layer["up"], res, res)

    # ---------------- fused up-x4 + output head ----------------
    out = pallas_final_head(h, params, R, cfg["embed"], cfg["ncls"])  # (B,4R,4R,ncls)
    if cfg["ncls"] == 1:
        return out.reshape(B, 1, 4 * R, 4 * R)
    return jnp.transpose(out, (0, 3, 1, 2))


# -----------------------------------------------------------------------------
if __name__ == "__main__":
    cfg, params = build_swin_unet_tem(seed=0)

    key = jax.random.PRNGKey(0)
    kx, kt = jax.random.split(key)
    B = 2
    # img_size=224 is the smallest spatial size compatible with patch_size=4,
    # window_size=7 and three patch-mergings (56 -> 28 -> 14 -> 7).
    x = jax.random.normal(kx, (B, cfg["in_ch"], cfg["img"], cfg["img"]), jnp.float32)
    t = jax.random.randint(kt, (B,), 0, cfg["T"])

    logits = swin_unet_tem_forward(cfg, params, x, t)
    logits = jax.block_until_ready(logits)

    assert logits.shape == (B, cfg["ncls"], cfg["img"], cfg["img"]), logits.shape
    assert bool(jnp.all(jnp.isfinite(logits)))
    print("KERNEL_OK")
</pallas_src>

<mosaic_0001>
module attributes {stable_mosaic.version = 11 : i64} {
  func.func @_linear_kernel(%arg0: i32, %arg1: memref<2x64xbf16, #tpu.memory_space<vmem>>, %arg2: memref<64x256xbf16, #tpu.memory_space<vmem>>, %arg3: memref<1x256xf32, #tpu.memory_space<vmem>>, %arg4: memref<2x256xbf16, #tpu.memory_space<vmem>>) attributes {dimension_semantics = [#tpu.dimension_semantics<parallel>], iteration_bounds = array<i64: 1>, scalar_prefetch = 0 : i64, scratch_operands = 0 : i64, tpu.core_type = #tpu.core_type<tc>, window_params = [{transform_indices = @transform_0, window_bounds = array<i64: 2, 64>}, {pipeline_mode = #tpu.pipeline_mode<synchronous>, transform_indices = @transform_1, window_bounds = array<i64: 64, 256>}, {pipeline_mode = #tpu.pipeline_mode<synchronous>, transform_indices = @transform_2, window_bounds = array<i64: 1, 256>}, {transform_indices = @transform_3, window_bounds = array<i64: 2, 256>}]} {
    %c0 = arith.constant 0 : index
    %c0_0 = arith.constant 0 : index
    %0 = vector.load %arg1[%c0, %c0_0] : memref<2x64xbf16, #tpu.memory_space<vmem>>, vector<2x64xbf16>
    %c0_1 = arith.constant 0 : index
    %c0_2 = arith.constant 0 : index
    %1 = vector.load %arg2[%c0_1, %c0_2] : memref<64x256xbf16, #tpu.memory_space<vmem>>, vector<64x256xbf16>
    %cst = arith.constant dense<0.000000e+00> : vector<2x256xf32>
    %2 = tpu.matmul %0, %1, %cst {dimension_numbers = #tpu.dot_dimension_numbers<[1], [0], [0], [1], [0, 0, 1, 1], [], []>} : vector<2x64xbf16>, vector<64x256xbf16>, vector<2x256xf32> -> vector<2x256xf32>
    %c0_3 = arith.constant 0 : index
    %c0_4 = arith.constant 0 : index
    %3 = vector.load %arg3[%c0_3, %c0_4] : memref<1x256xf32, #tpu.memory_space<vmem>>, vector<1x256xf32>
    %4 = vector.broadcast %3 : vector<1x256xf32> to vector<2x256xf32>
    %5 = arith.addf %2, %4 : vector<2x256xf32>
    %cst_5 = arith.constant 0.000000e+00 : f32
    %6 = vector.broadcast %cst_5 : f32 to vector<2x256xf32>
    %7 = arith.subf %6, %5 : vector<2x256xf32>
    %8 = math.exp %7 : vector<2x256xf32>
    %cst_6 = arith.constant 1.000000e+00 : f32
    %9 = vector.broadcast %cst_6 : f32 to vector<2x256xf32>
    %10 = arith.addf %9, %8 : vector<2x256xf32>
    %11 = tpu.reciprocal %10 {approx = true} : vector<2x256xf32> -> vector<2x256xf32>
    %12 = arith.mulf %5, %11 : vector<2x256xf32>
    %13 = arith.truncf %12 : vector<2x256xf32> to vector<2x256xbf16>
    %c0_7 = arith.constant 0 : index
    %c0_8 = arith.constant 0 : index
    %14 = vector.load %arg4[%c0_7, %c0_8] : memref<2x256xbf16, #tpu.memory_space<vmem>>, vector<2x256xbf16>
    tpu.vector_store %arg4[%c0_7, %c0_8], %13 {strides = array<i32>} : memref<2x256xbf16, #tpu.memory_space<vmem>>, vector<2x256xbf16>,
    return
  }
  func.func @transform_0(%arg0: i32) -> (i32, i32) {
    %c0_i32 = arith.constant 0 : i32
    %c0_i32_0 = arith.constant 0 : i32
    return %arg0, %c0_i32 : i32, i32
  }
  func.func @transform_1(%arg0: i32) -> (i32, i32) {
    %c0_i32 = arith.constant 0 : i32
    %c0_i32_0 = arith.constant 0 : i32
    %c0_i32_1 = arith.constant 0 : i32
    return %c0_i32, %c0_i32_0 : i32, i32
  }
  func.func @transform_2(%arg0: i32) -> (i32, i32) {
    %c0_i32 = arith.constant 0 : i32
    %c0_i32_0 = arith.constant 0 : i32
    %c0_i32_1 = arith.constant 0 : i32
    return %c0_i32, %c0_i32_0 : i32, i32
  }
  func.func @transform_3(%arg0: i32) -> (i32, i32) {
    %c0_i32 = arith.constant 0 : i32
    %c0_i32_0 = arith.constant 0 : i32
    return %arg0, %c0_i32 : i32, i32
  }
}

</mosaic_0001>

<llo_original>
// kernel: tpu_custom_call.1
$region0: #{tpu_custom_call.1}
  #allocation0 [shape = 'u32[]', space=smem, size = 0x4, offset = 0x4, fixed_abs, tag = 'smem constant byte address 0x4 - core index']
  #allocation1 [shape = 'u32[72,128]{1,0:T(1,128)}', space=vmem, size = 0x9000, scoped, tag = 'internal scratch']
  %s0 = inlined_call_operand.hbm [shape: bf16[2,64], index: 0, kind: input, shape index: {}]
  %s1 = inlined_call_operand.hbm [shape: bf16[64,256], index: 1, kind: input, shape index: {}]
  %s2 = inlined_call_operand.hbm [shape: f32[1,256], index: 2, kind: input, shape index: {}]
  %s3 = inlined_call_operand.hbm [shape: bf16[2,256], index: 3, kind: output, shape index: {}]
  %s4 = sld [smem:[#allocation0]]
  $region34: #{tpu_custom_call.1} parent=0
    _
  %s6 = ssub.s32 1, %s4
  %s7 = scalar_select 0, %s6, %s4
  $region1: #{tpu_custom_call.1} parent=0
    #allocation2 [shape = 'u8[512]{0}', space=vmem, size = 0x400, scoped, tag = 'input window, operand 0, single buffered']
    #allocation3 [shape = 's32[1]{0}', space=sflag, size = 0x4, scoped, tag = 'scoped memory for tpu_custom_call.1']
    #allocation4 [shape = 's32[1]{0}', space=sflag, size = 0x4, scoped, tag = 'scoped memory for tpu_custom_call.1']
    #allocation5 [shape = 'u8[32768]{0}', space=vmem, size = 0x8000, scoped, tag = 'input window, operand 1, single buffered']
    #allocation6 [shape = 's32[1]{0}', space=sflag, size = 0x4, scoped, tag = 'scoped memory for tpu_custom_call.1']
    #allocation7 [shape = 'u8[1024]{0}', space=vmem, size = 0x400, scoped, tag = 'input window, operand 2, single buffered']
    #allocation8 [shape = 'u8[1024]{0}', space=vmem, size = 0x400, scoped, tag = 'output window, operand 0, single buffered']
    %8 = vsyncpa [#allocation3], 0
    %9 = vsyncpa [#allocation6], 0
    %10 = vsyncpa [#allocation4], 0
    // Predicated region
    $region2: #{tpu_custom_call.1} parent=1 // pred_check
      _
    $region3: #{tpu_custom_call.1} parent=1 // pred_check_branch
      %12 = sbr.rel (0) target = $region5
    $region4: #{tpu_custom_call.1} parent=1 // pred_region
      %14 = vsyncadd [#allocation3], 0
      %s16 = sshll.u32 %s0, 4
      %s17 = int_to_ptr.hbm [resolvable:$true] %s16
      %s18 = sshll.u32 [#allocation2], 4
      %s19 = int_to_ptr.vmem [resolvable:$true] %s18
      %21 = dma.hbm_to_vmem [thread:$0]  %s17, 16, %s19, [#allocation3]
    $region5: #{tpu_custom_call.1} parent=1 // pred_fallthru
      _
    // Predicated region
    $region6: #{tpu_custom_call.1} parent=1 // pred_check
      _
    $region7: #{tpu_custom_call.1} parent=1 // pred_check_branch
      %23 = sbr.rel (0) target = $region9
    $region8: #{tpu_custom_call.1} parent=1 // pred_region
      %25 = vsyncadd [#allocation6], 0
      %s26 = sshll.u32 %s1, 4
      %s27 = int_to_ptr.hbm [resolvable:$true] %s26
      %s28 = sshll.u32 [#allocation5], 4
      %s29 = int_to_ptr.vmem [resolvable:$true] %s28
      %34 = dma.hbm_to_vmem [thread:$0]  %s27, 1024, %s29, [#allocation6], 128, 128, 8
    $region9: #{tpu_custom_call.1} parent=1 // pred_fallthru
      _
    // Predicated region
    $region10: #{tpu_custom_call.1} parent=1 // pred_check
      _
    $region11: #{tpu_custom_call.1} parent=1 // pred_check_branch
      %36 = sbr.rel (0) target = $region13
    $region12: #{tpu_custom_call.1} parent=1 // pred_region
      %38 = vsyncadd [#allocation6], 0
      %s40 = sshll.u32 %s2, 4
      %s41 = int_to_ptr.hbm [resolvable:$true] %s40
      %s42 = sshll.u32 [#allocation7], 4
      %s43 = int_to_ptr.vmem [resolvable:$true] %s42
      %45 = dma.hbm_to_vmem [thread:$0]  %s41, 32, %s43, [#allocation6]
    $region13: #{tpu_custom_call.1} parent=1 // pred_fallthru
      _
    // Predicated region
    $region14: #{tpu_custom_call.1} parent=1 // pred_check
      _
    $region15: #{tpu_custom_call.1} parent=1 // pred_check_branch
      %47 = sbr.rel (0) target = $region17
    $region16: #{tpu_custom_call.1} parent=1 // pred_region
      %49 = dma.done [#allocation3], 16
    $region17: #{tpu_custom_call.1} parent=1 // pred_fallthru
      _
    // Predicated region
    $region18: #{tpu_custom_call.1} parent=1 // pred_check
      _
    $region19: #{tpu_custom_call.1} parent=1 // pred_check_branch
      %51 = sbr.rel (0) target = $region21
    $region20: #{tpu_custom_call.1} parent=1 // pred_region
      %53 = dma.done [#allocation6], 1024
    $region21: #{tpu_custom_call.1} parent=1 // pred_fallthru
      _
    // Predicated region
    $region22: #{tpu_custom_call.1} parent=1 // pred_check
      _
    $region23: #{tpu_custom_call.1} parent=1 // pred_check_branch
      %55 = sbr.rel (0) target = $region25
    $region24: #{tpu_custom_call.1} parent=1 // pred_region
      %57 = dma.done [#allocation6], 32
    $region25: #{tpu_custom_call.1} parent=1 // pred_fallthru
      _
    %v59 = vld [vmem:[#allocation2] sm:$0x1]
    %v60 = vld [vmem:[#allocation5] sm:$0xff]
    %v61 = vld [vmem:[#allocation5 + $0x8] sm:$0xff]
    %v62 = vld [vmem:[#allocation5 + $0x10] sm:$0xff]
    %v63 = vld [vmem:[#allocation5 + $0x18] sm:$0xff]
    %v64 = vld [vmem:[#allocation5 + $0x20] sm:$0xff]
    %v65 = vld [vmem:[#allocation5 + $0x28] sm:$0xff]
    %v66 = vld [vmem:[#allocation5 + $0x30] sm:$0xff]
    %v67 = vld [vmem:[#allocation5 + $0x38] sm:$0xff]
    %v68 = vld [vmem:[#allocation7] sm:$0x3]
    %v70 = vperm.slane %v68, 0
    %v71 = vperm.slane %v68, 1
    %v82 = vunpack.c.l.b16 %v60
    %v83 = vunpack.c.h.b16 %v60
    %v84 = vunpack.c.l.b16 %v61
    %v85 = vunpack.c.h.b16 %v61
    %v86 = vunpack.c.l.b16 %v62
    %v87 = vunpack.c.h.b16 %v62
    %v88 = vunpack.c.l.b16 %v63
    %v89 = vunpack.c.h.b16 %v63
    %v90 = vunpack.c.l.b16 %v64
    %v91 = vunpack.c.h.b16 %v64
    %v92 = vunpack.c.l.b16 %v65
    %v93 = vunpack.c.h.b16 %v65
    %v94 = vunpack.c.l.b16 %v66
    %v95 = vunpack.c.h.b16 %v66
    %v96 = vunpack.c.l.b16 %v67
    %v97 = vunpack.c.h.b16 %v67
    %v98 = vpack.c.b16 %v84, %v82
    %v99 = vpack.c.b16 %v85, %v83
    %v100 = vpack.c.b16 %v88, %v86
    %v101 = vpack.c.b16 %v89, %v87
    %v102 = vpack.c.b16 %v92, %v90
    %v103 = vpack.c.b16 %v93, %v91
    %v104 = vpack.c.b16 %v96, %v94
    %v105 = vpack.c.b16 %v97, %v95
    %vm114 = vcmask 523264
    %v116 = vsel %vm114, %v59, 0
    %118 = vmatpush.bf16.msra.mxu0 0
    %119 = vmatpush.bf16.msra.mxu0 0
    %120 = vmatpush.bf16.msra.mxu0 0
    %121 = vmatpush.bf16.msra.mxu0 0
    %122 = vmatpush.bf16.msra.mxu0 %v104
    %123 = vmatpush.bf16.msra.mxu0 %v102
    %124 = vmatpush.bf16.msra.mxu0 %v100
    %125 = vmatpush.bf16.msra.mxu0 %v98
    %126 = vmatmul.bf16.gmra.mxu0 %v116
    %v127 = vpop.f32.mrf.mxu0
    %v128 = vadd.f32 %v70, %v127
    %v129 = vpop.f32.mrf.mxu0
    %130 = vdwg.mxu0
    %131 = vmatpush.bf16.msra.mxu0 0
    %132 = vmatpush.bf16.msra.mxu0 0
    %133 = vmatpush.bf16.msra.mxu0 0
    %134 = vmatpush.bf16.msra.mxu0 0
    %135 = vmatpush.bf16.msra.mxu0 %v105
    %136 = vmatpush.bf16.msra.mxu0 %v103
    %137 = vmatpush.bf16.msra.mxu0 %v101
    %138 = vmatpush.bf16.msra.mxu0 %v99
    %139 = vmatmul.bf16.gmra.mxu0 %v116
    %v140 = vpop.f32.mrf.mxu0
    %v141 = vadd.f32 %v71, %v140
    %v142 = vpop.f32.mrf.mxu0
    %143 = vdwg.mxu0
    %v144 = vsub.f32 0.0, %v128
    %v145 = vsub.f32 0.0, %v141
    %v146 = vmul.f32 %v144, 1.442695
    %v147 = vpow.pop %v146
    %v148 = vmul.f32 %v145, 1.442695
    %v149 = vpow.pop %v148
    %v150 = vadd.f32 %v147, 1.0
    %v151 = vadd.f32 %v149, 1.0
    %v152 = vrcp.pop %v150
    %v153 = vrcp.pop %v151
    %v154 = vmul.f32 %v128, %v152
    %v155 = vmul.f32 %v141, %v153
    %v156 = vpack.c.bf16 %v155, %v154
    %v158 = vrot.slane %v156, 3
    %vm159 = vcmask 1040384
    %v162 = vsel %vm159, %v156, %v158
    %164 = vst [vmem:[#allocation8] sm:$0x3] %v162
    // Predicated region
    $region26: #{tpu_custom_call.1} parent=1 // pred_check
      _
    $region27: #{tpu_custom_call.1} parent=1 // pred_check_branch
      %166 = sbr.rel (0) target = $region29
    $region28: #{tpu_custom_call.1} parent=1 // pred_region
      %168 = vsyncadd [#allocation4], 0
      %s170 = sshll.u32 [#allocation8], 4
      %s171 = int_to_ptr.vmem [resolvable:$true] %s170
      %s172 = sshll.u32 %s3, 4
      %s173 = int_to_ptr.hbm [resolvable:$true] %s172
      %175 = dma.vmem_to_hbm [thread:$0]  %s171, 32, %s173, [#allocation4]
    $region29: #{tpu_custom_call.1} parent=1 // pred_fallthru
      _
    // Predicated region
    $region30: #{tpu_custom_call.1} parent=1 // pred_check
      _
    $region31: #{tpu_custom_call.1} parent=1 // pred_check_branch
      %177 = sbr.rel (0) target = $region33
    $region32: #{tpu_custom_call.1} parent=1 // pred_region
      %179 = dma.done [#allocation4], 32
    $region33: #{tpu_custom_call.1} parent=1 // pred_fallthru
      _
    %180 = vsyncpa [#allocation3], 1
    %181 = vsyncpa [#allocation6], 1
    %182 = vsyncpa [#allocation4], 1

</llo_original>
